<compile_context>
chip_gen: v6e
topology: v6e:2x2x1
jax: 0.10.0
libtpu: 0.0.40
codegen_flags: <defaults>
</compile_context>

<pallas_src>
import functools

import jax
import jax.numpy as jnp
from jax.experimental import pallas as pl
from jax.experimental.pallas import tpu as pltpu


def _round_up(a: int, b: int) -> int:
    return (a + b - 1) // b * b


def _default_vmem_budget_bytes() -> int:
    """Per-generation VMEM budget for tile sizing (also used as vmem_limit_bytes)."""
    try:
        kind = jax.devices()[0].device_kind.lower()
    except Exception:  # pragma: no cover - defensive
        kind = ""
    if "v2" in kind or "v3" in kind:
        return 12 * 1024 * 1024
    if "v4" in kind or "v5" in kind or "v6" in kind:
        return 88 * 1024 * 1024          # 128 MiB physical VMEM per core
    return 44 * 1024 * 1024              # conservative (v7x: 64 MiB physical)


def _embed_kernel(idx_ref, w_ref, o_ref, *, num_q, group_size, fused):
    """o[n, :] = sum_q W[idx[n, q], :]  (quantizer offsets already folded into idx).

    idx_ref : (tile_n, num_q) int32 block of (offset) token indices.
    w_ref   : (v_pad, f_tile) slice of the embedding table; its block index is
              constant along the inner N grid axis, so it stays VMEM-resident.
    o_ref   : (tile_n, f_tile) output block.
    """
    idx = idx_ref[...]                                      # (tile_n, Q) int32
    tile_n = idx.shape[0]

    if fused:
        # Single one-hot over the whole (padded) vocab -> one MXU pass with K = V.
        v_rows = w_ref.shape[0]
        col = jax.lax.broadcasted_iota(jnp.int32, (tile_n, v_rows), 1)
        hit = col == idx[:, 0:1]
        for q in range(1, num_q):                           # Q is small & static
            hit = jnp.logical_or(hit, col == idx[:, q:q + 1])
        out = jnp.dot(hit.astype(w_ref.dtype), w_ref[...],
                      preferred_element_type=jnp.float32)
    else:
        # Per-quantizer one-hot against its table group (K = group_size each).
        col = jax.lax.broadcasted_iota(jnp.int32, (tile_n, group_size), 1)
        out = jnp.zeros((tile_n, o_ref.shape[1]), jnp.float32)
        for q in range(num_q):
            oh = (col == (idx[:, q:q + 1] - q * group_size)).astype(w_ref.dtype)
            out = out + jnp.dot(
                oh, w_ref[q * group_size:(q + 1) * group_size, :],
                preferred_element_type=jnp.float32)

    o_ref[...] = out.astype(o_ref.dtype)


def multivariate_embedding(x, weight, *, num_tokens, sum_over_quantizers,
                           tile_n=512, f_tile=None, compute_dtype=None,
                           vmem_budget_bytes=None):
    """JAX/Pallas equivalent of MultivariateEmbedding.forward (no pretrained proj).

    x             : (..., Q) integer token indices
    weight        : (num_quantizers * num_tokens, F) embedding table
    f_tile        : optional feature-tile width override (multiple of 128 when < F)
    compute_dtype : optional table/one-hot dtype for the matmul (f32 accumulation);
                    bfloat16 recommended on v6e/v7x (note: rounds the table, so
                    loosen tolerances accordingly).  Default: weight dtype.
    """
    out_dtype = weight.dtype
    x = x.astype(jnp.int32)
    *lead, q_dim = x.shape
    v, f = weight.shape

    if sum_over_quantizers:
        # Same offset trick as the torch forward: quantizer q reads rows
        # [q*num_tokens, (q+1)*num_tokens); gather + sum fused in the kernel.
        offs = jnp.arange(q_dim, dtype=jnp.int32) * num_tokens
        idx2d = x.reshape(-1, q_dim) + offs
        eff_q, group_size = q_dim, num_tokens
    else:
        # Plain lookup into the full (Q*T, F) table, no offset, no reduction.
        idx2d = x.reshape(-1, 1)
        eff_q, group_size = 1, v

    n = idx2d.shape[0]
    if vmem_budget_bytes is None:
        vmem_budget_bytes = _default_vmem_budget_bytes()
    vmem_budget_bytes = int(vmem_budget_bytes)

    w = weight if compute_dtype is None else weight.astype(compute_dtype)
    w_itemsize = jnp.dtype(w.dtype).itemsize
    out_itemsize = jnp.dtype(out_dtype).itemsize
    v_pad = _round_up(v, 8)

    # ---- Feature-dim tiling: keep a double-buffered (v_pad, f_tile) table slice
    # resident; tile F instead of collapsing tile_n when the table is large.
    table_budget = int(0.6 * vmem_budget_bytes)
    if f_tile is None:
        full_tbl = 2 * v_pad * f * w_itemsize
        if full_tbl <= table_budget and f <= 512:
            f_tile = f                                      # full F resident, unpadded
        else:
            cap = (table_budget // max(2 * v_pad * w_itemsize, 1)) // 128 * 128
            f_tile = max(128, min(512, cap))
    if f_tile >= f:
        f_tile, f_pad, n_f = f, f, 1
    else:
        f_pad = _round_up(f, 128)
        f_tile = max(128, (int(f_tile) // 128) * 128)        # lane-aligned when tiling
        while f_pad % f_tile:
            f_tile -= 128
        n_f = f_pad // f_tile

    # ---- One fused matmul (K = V) when the per-quantizer group is small; otherwise
    # loop per quantizer with K = num_tokens against slices of the resident block.
    fused = (eff_q == 1) or (num_tokens <= 128)

    # ---- Row tile: as large as fits after the resident table slice.
    table_bytes = 2 * v_pad * f_tile * w_itemsize           # double-buffered block
    onehot_cols = v_pad if fused else group_size
    per_row = (2 * eff_q * 4                                 # idx block (x2 buffers)
               + 2 * f_tile * out_itemsize                   # out block (x2 buffers)
               + f_tile * 4                                  # f32 accumulator/result
               + onehot_cols * max(w_itemsize, 4))           # live one-hot / mask
    tile_n = max(8, (min(int(tile_n), _round_up(max(n, 1), 8)) // 8) * 8)
    avail = vmem_budget_bytes - table_bytes
    cap_rows = (avail // per_row) // 8 * 8 if avail > 0 else 0
    tile_n = min(tile_n, cap_rows) if cap_rows >= 8 else 8

    # ---- Pad rows/table to the chosen tiling (padded index rows gather row 0 and
    # are sliced off below).
    n_padded = _round_up(max(n, 1), tile_n)
    if n_padded != n:
        idx2d = jnp.pad(idx2d, ((0, n_padded - n), (0, 0)))
    if (v_pad, f_pad) != (v, f):
        w = jnp.pad(w, ((0, v_pad - v), (0, f_pad - f)))

    kernel = functools.partial(_embed_kernel, num_q=eff_q,
                               group_size=group_size, fused=fused)

    out = pl.pallas_call(
        kernel,
        out_shape=jax.ShapeDtypeStruct((n_padded, f_pad), out_dtype),
        grid=(n_f, n_padded // tile_n),                      # F outer, N inner
        in_specs=[
            pl.BlockSpec((tile_n, eff_q), lambda fi, ni: (ni, 0)),
            # Table slice: index constant along the inner N axis -> fetched once per
            # F tile and kept resident; its DMA overlaps the pipeline prologue.
            pl.BlockSpec((v_pad, f_tile), lambda fi, ni: (0, fi)),
        ],
        out_specs=pl.BlockSpec((tile_n, f_tile), lambda fi, ni: (ni, fi)),
        compiler_params=pltpu.CompilerParams(
            dimension_semantics=("parallel", "parallel"),
            vmem_limit_bytes=vmem_budget_bytes),
    )(idx2d, w)

    if n_padded != n or f_pad != f:
        out = out[:n, :f]
    if sum_over_quantizers:
        return out.reshape(*lead, f)
    return out.reshape(*lead, q_dim, f)


def _reference(x, weight, *, num_tokens, sum_over_quantizers):
    """Pure-JAX reference matching the PyTorch forward."""
    x = x.astype(jnp.int32)
    if sum_over_quantizers:
        offs = jnp.arange(x.shape[-1], dtype=jnp.int32) * num_tokens
        x = x + offs
    emb = jnp.take(weight, x, axis=0)
    if sum_over_quantizers:
        emb = emb.sum(-2)
    return emb


if __name__ == "__main__":
    key = jax.random.PRNGKey(0)
    k_w, k_x, k_w2, k_x2 = jax.random.split(key, 4)

    # ---- Test 1/2: small config (fused one-hot path, single F tile, unpadded F).
    num_tokens, num_features, num_quantizers = 16, 32, 4
    batch, seq = 2, 8
    weight = jax.random.normal(
        k_w, (num_quantizers * num_tokens, num_features), dtype=jnp.float32)
    x = jax.random.randint(k_x, (batch, seq, num_quantizers), 0, num_tokens,
                           dtype=jnp.int32)

    out_sum = multivariate_embedding(
        x, weight, num_tokens=num_tokens, sum_over_quantizers=True)
    out_sum = jax.block_until_ready(out_sum)
    ref_sum = _reference(x, weight, num_tokens=num_tokens, sum_over_quantizers=True)
    assert out_sum.shape == (batch, seq, num_features)
    assert jnp.allclose(out_sum, ref_sum, atol=1e-5, rtol=1e-5)

    out_no_sum = multivariate_embedding(
        x, weight, num_tokens=num_tokens, sum_over_quantizers=False)
    out_no_sum = jax.block_until_ready(out_no_sum)
    ref_no_sum = _reference(x, weight, num_tokens=num_tokens,
                            sum_over_quantizers=False)
    assert out_no_sum.shape == (batch, seq, num_quantizers, num_features)
    assert jnp.allclose(out_no_sum, ref_no_sum, atol=1e-5, rtol=1e-5)

    # ---- Test 3: larger vocab -> per-quantizer (non-fused) path, plus explicit
    # F tiling (f_tile=128, two F tiles) and row padding (n=10 rows, tile_n=16).
    nt3, nf3, nq3 = 256, 256, 2
    b3, s3 = 2, 5
    weight3 = jax.random.normal(k_w2, (nq3 * nt3, nf3), dtype=jnp.float32)
    x3 = jax.random.randint(k_x2, (b3, s3, nq3), 0, nt3, dtype=jnp.int32)

    out3 = multivariate_embedding(
        x3, weight3, num_tokens=nt3, sum_over_quantizers=True, f_tile=128)
    out3 = jax.block_until_ready(out3)
    ref3 = _reference(x3, weight3, num_tokens=nt3, sum_over_quantizers=True)
    assert out3.shape == (b3, s3, nf3)
    assert jnp.allclose(out3, ref3, atol=1e-5, rtol=1e-5)

    print("KERNEL_OK")
</pallas_src>

<mosaic_0001>
module attributes {stable_mosaic.version = 11 : i64} {
  func.func @_embed_kernel(%arg0: i32, %arg1: i32, %arg2: memref<16x4xi32, #tpu.memory_space<vmem>>, %arg3: memref<64x32xf32, #tpu.memory_space<vmem>>, %arg4: memref<16x32xf32, #tpu.memory_space<vmem>>) attributes {dimension_semantics = [#tpu.dimension_semantics<parallel>, #tpu.dimension_semantics<parallel>], iteration_bounds = array<i64: 1, 1>, scalar_prefetch = 0 : i64, scratch_operands = 0 : i64, tpu.core_type = #tpu.core_type<tc>, window_params = [{transform_indices = @transform_0, window_bounds = array<i64: 16, 4>}, {transform_indices = @transform_1, window_bounds = array<i64: 64, 32>}, {transform_indices = @transform_2, window_bounds = array<i64: 16, 32>}]} {
    %c0 = arith.constant 0 : index
    %c0_0 = arith.constant 0 : index
    %0 = vector.load %arg2[%c0, %c0_0] : memref<16x4xi32, #tpu.memory_space<vmem>>, vector<16x4xi32>
    %1 = tpu.iota {dimensions = array<i32: 1>} : vector<16x64xi32>
    %2 = vector.extract_strided_slice %0 {offsets = [0, 0], sizes = [16, 1], strides = [1, 1]} : vector<16x4xi32> to vector<16x1xi32>
    %3 = vector.broadcast %2 : vector<16x1xi32> to vector<16x64xi32>
    %4 = arith.cmpi eq, %1, %3 : vector<16x64xi32>
    %5 = vector.extract_strided_slice %0 {offsets = [0, 1], sizes = [16, 1], strides = [1, 1]} : vector<16x4xi32> to vector<16x1xi32>
    %6 = vector.broadcast %5 : vector<16x1xi32> to vector<16x64xi32>
    %7 = arith.cmpi eq, %1, %6 : vector<16x64xi32>
    %8 = arith.ori %4, %7 : vector<16x64xi1>
    %9 = vector.extract_strided_slice %0 {offsets = [0, 2], sizes = [16, 1], strides = [1, 1]} : vector<16x4xi32> to vector<16x1xi32>
    %10 = vector.broadcast %9 : vector<16x1xi32> to vector<16x64xi32>
    %11 = arith.cmpi eq, %1, %10 : vector<16x64xi32>
    %12 = arith.ori %8, %11 : vector<16x64xi1>
    %13 = vector.extract_strided_slice %0 {offsets = [0, 3], sizes = [16, 1], strides = [1, 1]} : vector<16x4xi32> to vector<16x1xi32>
    %14 = vector.broadcast %13 : vector<16x1xi32> to vector<16x64xi32>
    %15 = arith.cmpi eq, %1, %14 : vector<16x64xi32>
    %16 = arith.ori %12, %15 : vector<16x64xi1>
    %17 = arith.extui %16 : vector<16x64xi1> to vector<16x64xi32>
    %18 = arith.sitofp %17 : vector<16x64xi32> to vector<16x64xf32>
    %c0_1 = arith.constant 0 : index
    %c0_2 = arith.constant 0 : index
    %19 = vector.load %arg3[%c0_1, %c0_2] : memref<64x32xf32, #tpu.memory_space<vmem>>, vector<64x32xf32>
    %cst = arith.constant dense<0.000000e+00> : vector<16x32xf32>
    %20 = tpu.matmul %18, %19, %cst {dimension_numbers = #tpu.dot_dimension_numbers<[1], [0], [0], [1], [0, 0, 1, 1], [], []>} : vector<16x64xf32>, vector<64x32xf32>, vector<16x32xf32> -> vector<16x32xf32>
    %c0_3 = arith.constant 0 : index
    %c0_4 = arith.constant 0 : index
    %21 = vector.load %arg4[%c0_3, %c0_4] : memref<16x32xf32, #tpu.memory_space<vmem>>, vector<16x32xf32>
    tpu.vector_store %arg4[%c0_3, %c0_4], %20 {strides = array<i32>} : memref<16x32xf32, #tpu.memory_space<vmem>>, vector<16x32xf32>,
    return
  }
  func.func @transform_0(%arg0: i32, %arg1: i32) -> (i32, i32) {
    %c0_i32 = arith.constant 0 : i32
    %c0_i32_0 = arith.constant 0 : i32
    return %arg1, %c0_i32 : i32, i32
  }
  func.func @transform_1(%arg0: i32, %arg1: i32) -> (i32, i32) {
    %c0_i32 = arith.constant 0 : i32
    %c0_i32_0 = arith.constant 0 : i32
    return %c0_i32, %arg0 : i32, i32
  }
  func.func @transform_2(%arg0: i32, %arg1: i32) -> (i32, i32) {
    %c0_i32 = arith.constant 0 : i32
    return %arg1, %arg0 : i32, i32
  }
}

</mosaic_0001>

<llo_original>
// kernel: tpu_custom_call.1
$region0: #{tpu_custom_call.1}
  #allocation0 [shape = 'u32[]', space=smem, size = 0x4, offset = 0x4, fixed_abs, tag = 'smem constant byte address 0x4 - core index']
  #allocation1 [shape = 'u32[144,128]{1,0:T(1,128)}', space=vmem, size = 0x12000, scoped, tag = 'internal scratch']
  %s0 = inlined_call_operand.vmem [shape: s32[16,4], index: 0, kind: input, shape index: {}]
  %s1 = inlined_call_operand.vmem [shape: f32[64,32], index: 1, kind: input, shape index: {}]
  %s2 = inlined_call_operand.hbm [shape: f32[16,32], index: 2, kind: output, shape index: {}]
  %s3 = sld [smem:[#allocation0]]
  $region18: #{tpu_custom_call.1} parent=0
    _
  %s5 = ssub.s32 1, %s3
  %s6 = scalar_select 0, %s5, %s3
  $region1: #{tpu_custom_call.1} parent=0
    #allocation2 [shape = 'u8[8192]{0}', space=vmem, size = 0x2000, scoped, tag = 'output window, operand 0, single buffered']
    #allocation3 [shape = 's32[1]{0}', space=sflag, size = 0x4, scoped, tag = 'scoped memory for tpu_custom_call.1']
    %7 = vsyncpa [#allocation3], 0
    // Predicated region
    $region2: #{tpu_custom_call.1} parent=1 // pred_check
      _
    $region3: #{tpu_custom_call.1} parent=1 // pred_check_branch
      %9 = sbr.rel (0) target = $region5
    $region4: #{tpu_custom_call.1} parent=1 // pred_region
      _
    $region5: #{tpu_custom_call.1} parent=1 // pred_fallthru
      _
    // Predicated region
    $region6: #{tpu_custom_call.1} parent=1 // pred_check
      _
    $region7: #{tpu_custom_call.1} parent=1 // pred_check_branch
      %11 = sbr.rel (0) target = $region9
    $region8: #{tpu_custom_call.1} parent=1 // pred_region
      _
    $region9: #{tpu_custom_call.1} parent=1 // pred_fallthru
      _
    %v12 = vld [vmem:[%s0] sm:$0xff]
    %v13 = vld [vmem:[%s0 + $0x8] sm:$0xff]
    %v14 = vlaneseq
    %v15 = vand.u32 %v14, 127
    %16 = vset.pattern.permute.xlu0 0
    %17 = vperm.xlu0 %16, %v12
    %v18 = vpop.permute.xlu0 %17
    %19 = vset.pattern.permute.xlu0 0
    %20 = vperm.xlu0 %19, %v13
    %v21 = vpop.permute.xlu0 %20
    %vm22 = vcmp.eq.s32.totalorder %v15, %v18
    %vm23 = vcmp.eq.s32.totalorder %v15, %v21
    %24 = vset.pattern.permute.xlu0 1
    %25 = vperm.xlu0 %24, %v12
    %v26 = vpop.permute.xlu0 %25
    %27 = vset.pattern.permute.xlu0 1
    %28 = vperm.xlu0 %27, %v13
    %v29 = vpop.permute.xlu0 %28
    %vm30 = vcmp.eq.s32.totalorder %v15, %v26
    %vm31 = vcmp.eq.s32.totalorder %v15, %v29
    %vm32 = vmor %vm22, %vm30
    %vm33 = vmor %vm23, %vm31
    %34 = vset.pattern.permute.xlu0 2
    %35 = vperm.xlu0 %34, %v12
    %v36 = vpop.permute.xlu0 %35
    %37 = vset.pattern.permute.xlu0 2
    %38 = vperm.xlu0 %37, %v13
    %v39 = vpop.permute.xlu0 %38
    %vm40 = vcmp.eq.s32.totalorder %v15, %v36
    %vm41 = vcmp.eq.s32.totalorder %v15, %v39
    %vm42 = vmor %vm32, %vm40
    %vm43 = vmor %vm33, %vm41
    %44 = vset.pattern.permute.xlu0 3
    %45 = vperm.xlu0 %44, %v12
    %v46 = vpop.permute.xlu0 %45
    %47 = vset.pattern.permute.xlu0 3
    %48 = vperm.xlu0 %47, %v13
    %v49 = vpop.permute.xlu0 %48
    %vm50 = vcmp.eq.s32.totalorder %v15, %v46
    %vm51 = vcmp.eq.s32.totalorder %v15, %v49
    %vm52 = vmor %vm42, %vm50
    %vm53 = vmor %vm43, %vm51
    %v54 = vsel %vm52, 1, 0
    %v55 = vsel %vm53, 1, 0
    %v56 = vcvt.s32.f32 %v54
    %v57 = vcvt.s32.f32 %v55
    %v58 = vld [vmem:[%s1] sm:$0xff]
    %v59 = vld [vmem:[%s1 + $0x8] sm:$0xff]
    %v60 = vld [vmem:[%s1 + $0x10] sm:$0xff]
    %v61 = vld [vmem:[%s1 + $0x18] sm:$0xff]
    %v62 = vld [vmem:[%s1 + $0x20] sm:$0xff]
    %v63 = vld [vmem:[%s1 + $0x28] sm:$0xff]
    %v64 = vld [vmem:[%s1 + $0x30] sm:$0xff]
    %v65 = vld [vmem:[%s1 + $0x38] sm:$0xff]
    %vm66 = vcmask 523264
    %v68 = vsel %vm66, %v56, 0
    %v71 = vsel %vm66, %v57, 0
    %73 = vmatprep.subr.mxu0 0.0
    %74 = vmatpush1.msra.mxu0 0.0
    %75 = vmatprep.subr.mxu0 0.0
    %76 = vmatpush1.msra.mxu0 0.0
    %77 = vmatprep.subr.mxu0 0.0
    %78 = vmatpush1.msra.mxu0 0.0
    %79 = vmatprep.subr.mxu0 0.0
    %80 = vmatpush1.msra.mxu0 0.0
    %81 = vmatprep.subr.mxu0 0.0
    %82 = vmatpush1.msra.mxu0 0.0
    %83 = vmatprep.subr.mxu0 0.0
    %84 = vmatpush1.msra.mxu0 0.0
    %85 = vmatprep.subr.mxu0 0.0
    %86 = vmatpush1.msra.mxu0 0.0
    %87 = vmatprep.subr.mxu0 0.0
    %88 = vmatpush1.msra.mxu0 0.0
    %89 = vmatprep.subr.mxu0 0.0
    %90 = vmatpush1.msra.mxu0 %v65
    %91 = vmatprep.subr.mxu0 0.0
    %92 = vmatpush1.msra.mxu0 %v64
    %93 = vmatprep.subr.mxu0 0.0
    %94 = vmatpush1.msra.mxu0 %v63
    %95 = vmatprep.subr.mxu0 0.0
    %96 = vmatpush1.msra.mxu0 %v62
    %97 = vmatprep.subr.mxu0 0.0
    %98 = vmatpush1.msra.mxu0 %v61
    %99 = vmatprep.subr.mxu0 0.0
    %100 = vmatpush1.msra.mxu0 %v60
    %101 = vmatprep.subr.mxu0 0.0
    %102 = vmatpush1.msra.mxu0 %v59
    %103 = vmatprep.subr.mxu0 0.0
    %104 = vmatpush1.msra.mxu0 %v58
    %105 = vmatprep.subr.mxu0 0.0
    %106 = vmatpush2.msra.mxu0 0.0
    %107 = vmatprep.subr.mxu0 0.0
    %108 = vmatpush2.msra.mxu0 0.0
    %109 = vmatprep.subr.mxu0 0.0
    %110 = vmatpush2.msra.mxu0 0.0
    %111 = vmatprep.subr.mxu0 0.0
    %112 = vmatpush2.msra.mxu0 0.0
    %113 = vmatprep.subr.mxu0 0.0
    %114 = vmatpush2.msra.mxu0 0.0
    %115 = vmatprep.subr.mxu0 0.0
    %116 = vmatpush2.msra.mxu0 0.0
    %117 = vmatprep.subr.mxu0 0.0
    %118 = vmatpush2.msra.mxu0 0.0
    %119 = vmatprep.subr.mxu0 0.0
    %120 = vmatpush2.msra.mxu0 0.0
    %121 = vmatprep.subr.mxu0 0.0
    %122 = vmatpush2.msra.mxu0 0.0
    %123 = vmatprep.subr.mxu0 0.0
    %124 = vmatpush2.msra.mxu0 0.0
    %125 = vmatprep.subr.mxu0 0.0
    %126 = vmatpush2.msra.mxu0 0.0
    %127 = vmatprep.subr.mxu0 0.0
    %128 = vmatpush2.msra.mxu0 0.0
    %129 = vmatprep.subr.mxu0 0.0
    %130 = vmatpush2.msra.mxu0 0.0
    %131 = vmatprep.subr.mxu0 0.0
    %132 = vmatpush2.msra.mxu0 0.0
    %133 = vmatprep.subr.mxu0 0.0
    %134 = vmatpush2.msra.mxu0 0.0
    %135 = vmatprep.subr.mxu0 0.0
    %136 = vmatpush2.msra.mxu0 0.0
    %137 = vmatprep.mubr.f32.mxu0 0.0
    %138 = vmatmul.mubr.f32.gmra.mxu0 %v68
    %v139 = vpop.f32.mrf.mxu0
    %v140 = vadd.f32 0.0, %v139
    %v141 = vpop.f32.mrf.mxu0
    %142 = vmatprep.mubr.f32.mxu0 0.0
    %143 = vmatmul.mubr.f32.gmra.mxu0 %v71
    %v144 = vpop.f32.mrf.mxu0
    %v145 = vadd.f32 0.0, %v144
    %v146 = vpop.f32.mrf.mxu0
    %147 = vdwg.mxu0
    %vm148 = vcmask 261120
    %149 = vst.msk [vmem:[#allocation2] sm:$0xff] %vm148, %v140
    %150 = vst.msk [vmem:[#allocation2 + $0x8] sm:$0xff] %vm148, %v145
    // Predicated region
    $region10: #{tpu_custom_call.1} parent=1 // pred_check
      _
    $region11: #{tpu_custom_call.1} parent=1 // pred_check_branch
      %152 = sbr.rel (0) target = $region13
    $region12: #{tpu_custom_call.1} parent=1 // pred_region
      %s154 = ssub.s32 256, 256
      %155 = vsyncadd [#allocation3], %s154
      %s156 = sshll.u32 [#allocation2], 4
      %s157 = int_to_ptr.vmem [resolvable:$true] %s156
      %162 = dma.vmem_to_hbm [thread:$0]  %s157, 256, %s2, [#allocation3], 128, 128, 8
    $region13: #{tpu_custom_call.1} parent=1 // pred_fallthru
      _
    // Predicated region
    $region14: #{tpu_custom_call.1} parent=1 // pred_check
      _
    $region15: #{tpu_custom_call.1} parent=1 // pred_check_branch
      %164 = sbr.rel (0) target = $region17
    $region16: #{tpu_custom_call.1} parent=1 // pred_region
      %165 = dma.done [#allocation3], 256
    $region17: #{tpu_custom_call.1} parent=1 // pred_fallthru
      _
    %166 = vsyncpa [#allocation3], 1

</llo_original>
